<compile_context>
chip_gen: v7x
topology: tpu7x:2x2x1
jax: 0.10.0
libtpu: 0.0.40
codegen_flags: <defaults>
</compile_context>

<pallas_src>
import jax
import jax.numpy as jnp
from jax.experimental import pallas as pl
from jax.experimental.pallas import tpu as pltpu

n_rep = 5
n_tpts = 16    # module uses a global n_tpts; small consistent value

FOLD = 8       # logical rows folded into the 128-lane axis (8 * 16 = 128 lanes)
TB_MAX = 4096  # folded-row tile: f32 x/x_hat/rep(lane-padded) ~6 MiB/buffer set,
               # double-buffered ~12-13 MiB; bf16 about half of that.


def ae_kernel(xf_ref, wx_ref, wr_ref, xhatf_ref, repf_ref):
    xf = xf_ref[...]
    # Two INDEPENDENT MXU matmuls, both reading the already-resident x tile.
    #   x_hat_folded = x_folded @ blockdiag(W1^T @ W2^T)   -> (TB, FOLD*T)
    #   rep_folded   = x_folded @ blockdiag(W1^T)          -> (TB, FOLD*R)
    xhatf_ref[...] = jnp.dot(
        xf, wx_ref[...], preferred_element_type=jnp.float32
    ).astype(xhatf_ref.dtype)
    repf_ref[...] = jnp.dot(
        xf, wr_ref[...], preferred_element_type=jnp.float32
    ).astype(repf_ref.dtype)


def _block_diag(w, n):
    """(a, b) -> (n*a, n*b) block-diagonal replication of w (one-time, tiny)."""
    a, b = w.shape
    eye = jnp.eye(n, dtype=w.dtype)
    return (eye[:, None, :, None] * w[None, :, None, :]).reshape(n * a, n * b)


def prepare_ae_weights(w1, w2, io_dtype=jnp.float32):
    """One-time weight prep (hoist out of the per-call path).

    w1: (n_rep, n_tpts) = fc1.weight; w2: (n_tpts, n_rep) = fc2.weight.
    Returns (wx, wr): folded block-diagonal weights in `io_dtype`.
    """
    w1t = w1.astype(jnp.float32).T                 # (T, R)
    w_comb = w1t @ w2.astype(jnp.float32).T        # (T, T), rank-R composed weight
    wx = _block_diag(w_comb, FOLD).astype(io_dtype)  # (128, 128) for T=16
    wr = _block_diag(w1t, FOLD).astype(io_dtype)     # (128, 40)
    return wx, wr


@jax.jit
def ae_forward(x, wx, wr):
    """x: (B, n_tpts); wx/wr: prepared folded weights (prepare_ae_weights).
    Returns (x_hat, rep) in wx.dtype, matching the PyTorch module."""
    B, T = x.shape
    R = wr.shape[1] // FOLD
    io_dtype = wx.dtype

    # Pad B only up to a multiple of FOLD (<= 7 extra rows); no tile-size padding.
    B_pad = pl.cdiv(B, FOLD) * FOLD
    xp = x.astype(io_dtype)
    if B_pad != B:
        xp = jnp.pad(xp, ((0, B_pad - B), (0, 0)))
    Bf = B_pad // FOLD
    xf = xp.reshape(Bf, FOLD * T)   # row-major fold: contiguous, layout-only

    # Tile: fixed TB_MAX for large batches (partial last block handled by
    # Pallas masking: OOB input rows are undefined but row-independent, OOB
    # output rows are dropped).  For small batches the block simply equals the
    # full folded-batch dim.  jax.jit retraces per distinct batch shape anyway,
    # so this min() does not add recompiles.
    TB = min(TB_MAX, Bf)
    grid = (pl.cdiv(Bf, TB),)

    xhatf, repf = pl.pallas_call(
        ae_kernel,
        out_shape=(
            jax.ShapeDtypeStruct((Bf, FOLD * T), io_dtype),   # folded x_hat
            jax.ShapeDtypeStruct((Bf, FOLD * R), io_dtype),   # folded rep
        ),
        grid=grid,
        in_specs=[
            pl.BlockSpec((TB, FOLD * T), lambda i: (i, 0)),          # x tile
            pl.BlockSpec((FOLD * T, FOLD * T), lambda i: (0, 0)),    # wx (resident)
            pl.BlockSpec((FOLD * T, FOLD * R), lambda i: (0, 0)),    # wr (resident)
        ],
        out_specs=(
            pl.BlockSpec((TB, FOLD * T), lambda i: (i, 0)),
            pl.BlockSpec((TB, FOLD * R), lambda i: (i, 0)),
        ),
        compiler_params=pltpu.CompilerParams(
            dimension_semantics=("parallel",),   # megacore sharding on v7x
            vmem_limit_bytes=32 * 1024 * 1024,   # > v5e's 16 MiB scoped default
        ),
    )(xf, wx, wr)

    x_hat = xhatf.reshape(B_pad, T)
    rep = repf.reshape(B_pad, R)
    if B_pad != B:   # no-op (no slice) when B % FOLD == 0
        x_hat = x_hat[:B]
        rep = rep[:B]
    return x_hat, rep


def ae_apply(x, w1, w2, io_dtype=jnp.float32):
    """Convenience one-call wrapper (weight prep + forward)."""
    wx, wr = prepare_ae_weights(w1, w2, io_dtype)
    return ae_forward(x, wx, wr)


if __name__ == "__main__":
    key = jax.random.PRNGKey(0)
    kx, k1, k2, kx2, kx3 = jax.random.split(key, 5)

    weight_std = 0.1
    # Deterministic parameter init (matches nn.init.normal_(std=weight_std)).
    w1 = weight_std * jax.random.normal(k1, (n_rep, n_tpts), dtype=jnp.float32)
    w2 = weight_std * jax.random.normal(k2, (n_tpts, n_rep), dtype=jnp.float32)

    # Hoisted weight prep (done once, reused across calls).
    wx32, wr32 = prepare_ae_weights(w1, w2, jnp.float32)

    # Test 1: small batch that fills exactly one fold (B = 8).
    B = 8
    x = jax.random.normal(kx, (B, n_tpts), dtype=jnp.float32)
    x_hat, rep = ae_forward(x, wx32, wr32)
    jax.block_until_ready((x_hat, rep))
    rep_ref = x @ w1.T
    xhat_ref = rep_ref @ w2.T
    assert rep.shape == (B, n_rep) and x_hat.shape == (B, n_tpts)
    assert jnp.allclose(rep, rep_ref, atol=1e-5)
    assert jnp.allclose(x_hat, xhat_ref, atol=1e-5)

    # Test 2: batch not a multiple of the fold factor (exercises 7-row pad path
    # and a block whose sublane dim equals the full folded-batch dim).
    B2 = 50
    x2 = jax.random.normal(kx2, (B2, n_tpts), dtype=jnp.float32)
    x_hat2, rep2 = ae_forward(x2, wx32, wr32)
    jax.block_until_ready((x_hat2, rep2))
    rep2_ref = x2 @ w1.T
    xhat2_ref = rep2_ref @ w2.T
    assert rep2.shape == (B2, n_rep) and x_hat2.shape == (B2, n_tpts)
    assert jnp.allclose(rep2, rep2_ref, atol=1e-5)
    assert jnp.allclose(x_hat2, xhat2_ref, atol=1e-5)

    # Test 3: multi-tile grid with a partial last block (Bf = 5000 > TB_MAX).
    B3 = 8 * 5000
    x3 = jax.random.normal(kx3, (B3, n_tpts), dtype=jnp.float32)
    x_hat3, rep3 = ae_forward(x3, wx32, wr32)
    jax.block_until_ready((x_hat3, rep3))
    rep3_ref = x3 @ w1.T
    xhat3_ref = rep3_ref @ w2.T
    assert rep3.shape == (B3, n_rep) and x_hat3.shape == (B3, n_tpts)
    assert jnp.allclose(rep3, rep3_ref, atol=1e-5)
    assert jnp.allclose(x_hat3, xhat3_ref, atol=1e-5)

    # Test 4: optional bf16-I/O path (halves HBM traffic; f32 accumulation kept).
    wxbf, wrbf = prepare_ae_weights(w1, w2, jnp.bfloat16)
    x_hat_bf, rep_bf = ae_forward(x2, wxbf, wrbf)
    jax.block_until_ready((x_hat_bf, rep_bf))
    assert x_hat_bf.dtype == jnp.bfloat16 and rep_bf.dtype == jnp.bfloat16
    assert jnp.allclose(rep_bf.astype(jnp.float32), rep2_ref, atol=5e-2)
    assert jnp.allclose(x_hat_bf.astype(jnp.float32), xhat2_ref, atol=5e-2)

    print("KERNEL_OK")
</pallas_src>

<mosaic_0001>
module attributes {stable_mosaic.version = 11 : i64} {
  func.func @ae_kernel(%arg0: i32, %arg1: memref<1x128xf32, #tpu.memory_space<vmem>>, %arg2: memref<128x128xf32, #tpu.memory_space<vmem>>, %arg3: memref<128x40xf32, #tpu.memory_space<vmem>>, %arg4: memref<1x128xf32, #tpu.memory_space<vmem>>, %arg5: memref<1x40xf32, #tpu.memory_space<vmem>>) attributes {dimension_semantics = [#tpu.dimension_semantics<parallel>], iteration_bounds = array<i64: 1>, scalar_prefetch = 0 : i64, scratch_operands = 0 : i64, tpu.core_type = #tpu.core_type<tc>, window_params = [{transform_indices = @transform_0, window_bounds = array<i64: 1, 128>}, {pipeline_mode = #tpu.pipeline_mode<synchronous>, transform_indices = @transform_1, window_bounds = array<i64: 128, 128>}, {pipeline_mode = #tpu.pipeline_mode<synchronous>, transform_indices = @transform_2, window_bounds = array<i64: 128, 40>}, {transform_indices = @transform_3, window_bounds = array<i64: 1, 128>}, {transform_indices = @transform_4, window_bounds = array<i64: 1, 40>}]} {
    %c0 = arith.constant 0 : index
    %c0_0 = arith.constant 0 : index
    %0 = vector.load %arg1[%c0, %c0_0] : memref<1x128xf32, #tpu.memory_space<vmem>>, vector<1x128xf32>
    %c0_1 = arith.constant 0 : index
    %c0_2 = arith.constant 0 : index
    %1 = vector.load %arg2[%c0_1, %c0_2] : memref<128x128xf32, #tpu.memory_space<vmem>>, vector<128x128xf32>
    %cst = arith.constant dense<0.000000e+00> : vector<1x128xf32>
    %2 = tpu.matmul %0, %1, %cst {dimension_numbers = #tpu.dot_dimension_numbers<[1], [0], [0], [1], [0, 0, 1, 1], [], []>} : vector<1x128xf32>, vector<128x128xf32>, vector<1x128xf32> -> vector<1x128xf32>
    %c0_3 = arith.constant 0 : index
    %c0_4 = arith.constant 0 : index
    %3 = vector.load %arg4[%c0_3, %c0_4] : memref<1x128xf32, #tpu.memory_space<vmem>>, vector<1x128xf32>
    tpu.vector_store %arg4[%c0_3, %c0_4], %2 {strides = array<i32>} : memref<1x128xf32, #tpu.memory_space<vmem>>, vector<1x128xf32>,
    %c0_5 = arith.constant 0 : index
    %c0_6 = arith.constant 0 : index
    %4 = vector.load %arg3[%c0_5, %c0_6] : memref<128x40xf32, #tpu.memory_space<vmem>>, vector<128x40xf32>
    %cst_7 = arith.constant dense<0.000000e+00> : vector<1x40xf32>
    %5 = tpu.matmul %0, %4, %cst_7 {dimension_numbers = #tpu.dot_dimension_numbers<[1], [0], [0], [1], [0, 0, 1, 1], [], []>} : vector<1x128xf32>, vector<128x40xf32>, vector<1x40xf32> -> vector<1x40xf32>
    %c0_8 = arith.constant 0 : index
    %c0_9 = arith.constant 0 : index
    %6 = vector.load %arg5[%c0_8, %c0_9] : memref<1x40xf32, #tpu.memory_space<vmem>>, vector<1x40xf32>
    tpu.vector_store %arg5[%c0_8, %c0_9], %5 {strides = array<i32>} : memref<1x40xf32, #tpu.memory_space<vmem>>, vector<1x40xf32>,
    return
  }
  func.func @transform_0(%arg0: i32) -> (i32, i32) {
    %c0_i32 = arith.constant 0 : i32
    %c0_i32_0 = arith.constant 0 : i32
    return %arg0, %c0_i32 : i32, i32
  }
  func.func @transform_1(%arg0: i32) -> (i32, i32) {
    %c0_i32 = arith.constant 0 : i32
    %c0_i32_0 = arith.constant 0 : i32
    %c0_i32_1 = arith.constant 0 : i32
    return %c0_i32, %c0_i32_0 : i32, i32
  }
  func.func @transform_2(%arg0: i32) -> (i32, i32) {
    %c0_i32 = arith.constant 0 : i32
    %c0_i32_0 = arith.constant 0 : i32
    %c0_i32_1 = arith.constant 0 : i32
    return %c0_i32, %c0_i32_0 : i32, i32
  }
  func.func @transform_3(%arg0: i32) -> (i32, i32) {
    %c0_i32 = arith.constant 0 : i32
    %c0_i32_0 = arith.constant 0 : i32
    return %arg0, %c0_i32 : i32, i32
  }
  func.func @transform_4(%arg0: i32) -> (i32, i32) {
    %c0_i32 = arith.constant 0 : i32
    %c0_i32_0 = arith.constant 0 : i32
    return %arg0, %c0_i32 : i32, i32
  }
}

</mosaic_0001>

<llo_original>
// kernel: ae_forward.1
$region0: #{ae_forward.1}
  #allocation0 [shape = 'u32[]', space=smem, size = 0x4, offset = 0x4, fixed_abs, tag = 'smem constant byte address 0x4 - core index']
  #allocation1 [shape = 'u32[144,128]{1,0:T(1,128)}', space=vmem, size = 0x12000, scoped, tag = 'internal scratch']
  %s0 = inlined_call_operand.vmem [shape: f32[1,128], index: 0, kind: input, shape index: {}]
  %s1 = inlined_call_operand.vmem [shape: f32[128,128], index: 1, kind: input, shape index: {}]
  %s2 = inlined_call_operand.vmem [shape: f32[128,40], index: 2, kind: input, shape index: {}]
  %s3 = inlined_call_operand.vmem [shape: f32[1,128], index: 3, kind: output, shape index: {0}]
  %s4 = inlined_call_operand.vmem [shape: f32[1,40], index: 4, kind: output, shape index: {1}]
  %5 = xla_tuple %s3, %s4
  %s6 = sld [smem:[#allocation0]]
  $region30: #{ae_forward.1} parent=0
    _
  %s8 = ssub.s32 1, %s6
  %s9 = scalar_select 0, %s8, %s6
  // Predicated region
  $region2: #{ae_forward.1} parent=0 // pred_check
    _
  $region3: #{ae_forward.1} parent=0 // pred_check_branch
    %11 = sbr.rel (0) target = $region5
  $region4: #{ae_forward.1} parent=0 // pred_region
    _
  $region5: #{ae_forward.1} parent=0 // pred_fallthru
    _
  // Predicated region
  $region6: #{ae_forward.1} parent=0 // pred_check
    _
  $region7: #{ae_forward.1} parent=0 // pred_check_branch
    %13 = sbr.rel (0) target = $region9
  $region8: #{ae_forward.1} parent=0 // pred_region
    _
  $region9: #{ae_forward.1} parent=0 // pred_fallthru
    _
  // Predicated region
  $region10: #{ae_forward.1} parent=0 // pred_check
    _
  $region11: #{ae_forward.1} parent=0 // pred_check_branch
    %15 = sbr.rel (0) target = $region13
  $region12: #{ae_forward.1} parent=0 // pred_region
    _
  $region13: #{ae_forward.1} parent=0 // pred_fallthru
    _
  %v16 = vld [vmem:[%s0] sm:$0x1]
  %v17 = vld [vmem:[%s1] sm:$0xff]
  %v18 = vld [vmem:[%s1 + $0x8] sm:$0xff]
  %v19 = vld [vmem:[%s1 + $0x10] sm:$0xff]
  %v20 = vld [vmem:[%s1 + $0x18] sm:$0xff]
  %v21 = vld [vmem:[%s1 + $0x20] sm:$0xff]
  %v22 = vld [vmem:[%s1 + $0x28] sm:$0xff]
  %v23 = vld [vmem:[%s1 + $0x30] sm:$0xff]
  %v24 = vld [vmem:[%s1 + $0x38] sm:$0xff]
  %v25 = vld [vmem:[%s1 + $0x40] sm:$0xff]
  %v26 = vld [vmem:[%s1 + $0x48] sm:$0xff]
  %v27 = vld [vmem:[%s1 + $0x50] sm:$0xff]
  %v28 = vld [vmem:[%s1 + $0x58] sm:$0xff]
  %v29 = vld [vmem:[%s1 + $0x60] sm:$0xff]
  %v30 = vld [vmem:[%s1 + $0x68] sm:$0xff]
  %v31 = vld [vmem:[%s1 + $0x70] sm:$0xff]
  %v32 = vld [vmem:[%s1 + $0x78] sm:$0xff]
  %33 = vmatprep.subr.mxu0 0.0
  %34 = vmatpush1.msra.mxu0 %v17
  %35 = vmatprep.subr.mxu0 0.0
  %36 = vmatpush1.msra.mxu0 %v18
  %37 = vmatprep.subr.mxu0 0.0
  %38 = vmatpush1.msra.mxu0 %v19
  %39 = vmatprep.subr.mxu0 0.0
  %40 = vmatpush1.msra.mxu0 %v20
  %41 = vmatprep.subr.mxu0 0.0
  %42 = vmatpush1.msra.mxu0 %v21
  %43 = vmatprep.subr.mxu0 0.0
  %44 = vmatpush1.msra.mxu0 %v22
  %45 = vmatprep.subr.mxu0 0.0
  %46 = vmatpush1.msra.mxu0 %v23
  %47 = vmatprep.subr.mxu0 0.0
  %48 = vmatpush1.msra.mxu0 %v24
  %49 = vmatprep.subr.mxu0 0.0
  %50 = vmatpush1.msra.mxu0 %v25
  %51 = vmatprep.subr.mxu0 0.0
  %52 = vmatpush1.msra.mxu0 %v26
  %53 = vmatprep.subr.mxu0 0.0
  %54 = vmatpush1.msra.mxu0 %v27
  %55 = vmatprep.subr.mxu0 0.0
  %56 = vmatpush1.msra.mxu0 %v28
  %57 = vmatprep.subr.mxu0 0.0
  %58 = vmatpush1.msra.mxu0 %v29
  %59 = vmatprep.subr.mxu0 0.0
  %60 = vmatpush1.msra.mxu0 %v30
  %61 = vmatprep.subr.mxu0 0.0
  %62 = vmatpush1.msra.mxu0 %v31
  %63 = vmatprep.subr.mxu0 0.0
  %64 = vmatpush1.msra.mxu0 %v32
  %65 = vmatprep.subr.mxu0 0.0
  %66 = vmatpush1.msra.mxu0 0.0
  %67 = vmatprep.subr.mxu0 0.0
  %68 = vmatpush1.msra.mxu0 0.0
  %69 = vmatprep.subr.mxu0 0.0
  %70 = vmatpush1.msra.mxu0 0.0
  %71 = vmatprep.subr.mxu0 0.0
  %72 = vmatpush1.msra.mxu0 0.0
  %73 = vmatprep.subr.mxu0 0.0
  %74 = vmatpush1.msra.mxu0 0.0
  %75 = vmatprep.subr.mxu0 0.0
  %76 = vmatpush1.msra.mxu0 0.0
  %77 = vmatprep.subr.mxu0 0.0
  %78 = vmatpush1.msra.mxu0 0.0
  %79 = vmatprep.subr.mxu0 0.0
  %80 = vmatpush1.msra.mxu0 0.0
  %81 = vmatprep.subr.mxu0 0.0
  %82 = vmatpush1.msra.mxu0 0.0
  %83 = vmatprep.subr.mxu0 0.0
  %84 = vmatpush1.msra.mxu0 0.0
  %85 = vmatprep.subr.mxu0 0.0
  %86 = vmatpush1.msra.mxu0 0.0
  %87 = vmatprep.subr.mxu0 0.0
  %88 = vmatpush1.msra.mxu0 0.0
  %89 = vmatprep.subr.mxu0 0.0
  %90 = vmatpush1.msra.mxu0 0.0
  %91 = vmatprep.subr.mxu0 0.0
  %92 = vmatpush1.msra.mxu0 0.0
  %93 = vmatprep.subr.mxu0 0.0
  %94 = vmatpush1.msra.mxu0 0.0
  %95 = vmatprep.subr.mxu0 0.0
  %96 = vmatpush1.msra.mxu0 0.0
  %97 = vmatprep.mubr.f32.mxu0 0.0
  %98 = vmatmul.mubr.f32.gmra.mrb[0].mxu0 %v16
  %v99 = vpop.f32.mrb[0].mxu0
  %v100 = vadd.f32 0.0, %v99
  %v101 = vpop.f32.mrb[0].mxu0
  %102 = vdwg.mxu0
  %103 = vst [vmem:[%s3] sm:$0x1] %v100
  %v104 = vld [vmem:[%s2] sm:$0xff]
  %v105 = vld [vmem:[%s2 + $0x8] sm:$0xff]
  %v106 = vld [vmem:[%s2 + $0x10] sm:$0xff]
  %v107 = vld [vmem:[%s2 + $0x18] sm:$0xff]
  %v108 = vld [vmem:[%s2 + $0x20] sm:$0xff]
  %v109 = vld [vmem:[%s2 + $0x28] sm:$0xff]
  %v110 = vld [vmem:[%s2 + $0x30] sm:$0xff]
  %v111 = vld [vmem:[%s2 + $0x38] sm:$0xff]
  %v112 = vld [vmem:[%s2 + $0x40] sm:$0xff]
  %v113 = vld [vmem:[%s2 + $0x48] sm:$0xff]
  %v114 = vld [vmem:[%s2 + $0x50] sm:$0xff]
  %v115 = vld [vmem:[%s2 + $0x58] sm:$0xff]
  %v116 = vld [vmem:[%s2 + $0x60] sm:$0xff]
  %v117 = vld [vmem:[%s2 + $0x68] sm:$0xff]
  %v118 = vld [vmem:[%s2 + $0x70] sm:$0xff]
  %v119 = vld [vmem:[%s2 + $0x78] sm:$0xff]
  %120 = vmatprep.subr.mxu0 0.0
  %121 = vmatpush1.msra.mxu0 %v104
  %122 = vmatprep.subr.mxu0 0.0
  %123 = vmatpush1.msra.mxu0 %v105
  %124 = vmatprep.subr.mxu0 0.0
  %125 = vmatpush1.msra.mxu0 %v106
  %126 = vmatprep.subr.mxu0 0.0
  %127 = vmatpush1.msra.mxu0 %v107
  %128 = vmatprep.subr.mxu0 0.0
  %129 = vmatpush1.msra.mxu0 %v108
  %130 = vmatprep.subr.mxu0 0.0
  %131 = vmatpush1.msra.mxu0 %v109
  %132 = vmatprep.subr.mxu0 0.0
  %133 = vmatpush1.msra.mxu0 %v110
  %134 = vmatprep.subr.mxu0 0.0
  %135 = vmatpush1.msra.mxu0 %v111
  %136 = vmatprep.subr.mxu0 0.0
  %137 = vmatpush1.msra.mxu0 %v112
  %138 = vmatprep.subr.mxu0 0.0
  %139 = vmatpush1.msra.mxu0 %v113
  %140 = vmatprep.subr.mxu0 0.0
  %141 = vmatpush1.msra.mxu0 %v114
  %142 = vmatprep.subr.mxu0 0.0
  %143 = vmatpush1.msra.mxu0 %v115
  %144 = vmatprep.subr.mxu0 0.0
  %145 = vmatpush1.msra.mxu0 %v116
  %146 = vmatprep.subr.mxu0 0.0
  %147 = vmatpush1.msra.mxu0 %v117
  %148 = vmatprep.subr.mxu0 0.0
  %149 = vmatpush1.msra.mxu0 %v118
  %150 = vmatprep.subr.mxu0 0.0
  %151 = vmatpush1.msra.mxu0 %v119
  %152 = vmatprep.subr.mxu0 0.0
  %153 = vmatpush1.msra.mxu0 0.0
  %154 = vmatprep.subr.mxu0 0.0
  %155 = vmatpush1.msra.mxu0 0.0
  %156 = vmatprep.subr.mxu0 0.0
  %157 = vmatpush1.msra.mxu0 0.0
  %158 = vmatprep.subr.mxu0 0.0
  %159 = vmatpush1.msra.mxu0 0.0
  %160 = vmatprep.subr.mxu0 0.0
  %161 = vmatpush1.msra.mxu0 0.0
  %162 = vmatprep.subr.mxu0 0.0
  %163 = vmatpush1.msra.mxu0 0.0
  %164 = vmatprep.subr.mxu0 0.0
  %165 = vmatpush1.msra.mxu0 0.0
  %166 = vmatprep.subr.mxu0 0.0
  %167 = vmatpush1.msra.mxu0 0.0
  %168 = vmatprep.subr.mxu0 0.0
  %169 = vmatpush1.msra.mxu0 0.0
  %170 = vmatprep.subr.mxu0 0.0
  %171 = vmatpush1.msra.mxu0 0.0
  %172 = vmatprep.subr.mxu0 0.0
  %173 = vmatpush1.msra.mxu0 0.0
  %174 = vmatprep.subr.mxu0 0.0
  %175 = vmatpush1.msra.mxu0 0.0
  %176 = vmatprep.subr.mxu0 0.0
  %177 = vmatpush1.msra.mxu0 0.0
  %178 = vmatprep.subr.mxu0 0.0
  %179 = vmatpush1.msra.mxu0 0.0
  %180 = vmatprep.subr.mxu0 0.0
  %181 = vmatpush1.msra.mxu0 0.0
  %182 = vmatprep.subr.mxu0 0.0
  %183 = vmatpush1.msra.mxu0 0.0
  %184 = vmatprep.mubr.f32.mxu0 0.0
  %185 = vmatmul.mubr.f32.gmra.mrb[0].mxu0 %v16
  %v186 = vpop.f32.mrb[0].mxu0
  %v187 = vadd.f32 0.0, %v186
  %v188 = vpop.f32.mrb[0].mxu0
  %189 = vdwg.mxu0
  %vm190 = vcmask 319488
  %191 = vst.msk [vmem:[%s4] sm:$0x1] %vm190, %v187
  // Predicated region
  $region14: #{ae_forward.1} parent=0 // pred_check
    _
  $region15: #{ae_forward.1} parent=0 // pred_check_branch
    %193 = sbr.rel (0) target = $region17
  $region16: #{ae_forward.1} parent=0 // pred_region
    _
  $region17: #{ae_forward.1} parent=0 // pred_fallthru
    _
  // Predicated region
  $region18: #{ae_forward.1} parent=0 // pred_check
    _
  $region19: #{ae_forward.1} parent=0 // pred_check_branch
    %195 = sbr.rel (0) target = $region21
  $region20: #{ae_forward.1} parent=0 // pred_region
    _
  $region21: #{ae_forward.1} parent=0 // pred_fallthru
    _
  // Predicated region
  $region22: #{ae_forward.1} parent=0 // pred_check
    _
  $region23: #{ae_forward.1} parent=0 // pred_check_branch
    %197 = sbr.rel (0) target = $region25
  $region24: #{ae_forward.1} parent=0 // pred_region
    _
  $region25: #{ae_forward.1} parent=0 // pred_fallthru
    _
  // Predicated region
  $region26: #{ae_forward.1} parent=0 // pred_check
    _
  $region27: #{ae_forward.1} parent=0 // pred_check_branch
    %199 = sbr.rel (0) target = $region29
  $region28: #{ae_forward.1} parent=0 // pred_region
    _
  $region29: #{ae_forward.1} parent=0 // pred_fallthru
    _

</llo_original>
